<compile_context>
chip_gen: v6e
topology: v6e:2x2x1
jax: 0.10.0
libtpu: 0.0.40
codegen_flags: <defaults>
</compile_context>

<pallas_src>
import jax
import jax.numpy as jnp
from jax.experimental import pallas as pl
from jax.experimental.pallas import tpu as pltpu


def _round_up(x, m):
    return ((x + m - 1) // m) * m


def _mlp_kernel(x_ref, w1_ref, b1_ref, w2_ref, b2_ref, o_ref):
    # Layer 1 (block-diagonal packed): bf16 x bf16 MXU matmul, f32 accumulation.
    # One pass yields the hidden activations of P batch rows per sublane row.
    h = jnp.dot(x_ref[...], w1_ref[...], preferred_element_type=jnp.float32)
    h = jnp.maximum(h + b1_ref[...], 0.0)
    # Layer 2 (block-diagonal): cast activations to bf16 so the MXU stays in
    # single-pass bf16 mode; accumulate in f32. (blk, P*H_pad) @ (P*H_pad, P).
    z = jnp.dot(h.astype(jnp.bfloat16), w2_ref[...],
                preferred_element_type=jnp.float32) + b2_ref[...]
    # sigmoid: exp + reciprocal both go to the otherwise-idle EUP slot.
    o_ref[...] = pl.reciprocal(1.0 + jnp.exp(-z), approx=True).astype(o_ref.dtype)


def simulate_net_forward(x, w1, b1, w2, b2, *, block_rows=2048):
    """x: (B, F) float. w1: (20, F), b1: (20,), w2: (1, 20), b2: (1,) (PyTorch Linear
    layout). Returns (B, 1) float32 = sigmoid(relu(x @ w1.T + b1) @ w2.T + b2)."""
    x = jnp.asarray(x, jnp.float32)
    w1 = jnp.asarray(w1, jnp.float32)
    b1 = jnp.asarray(b1, jnp.float32)
    w2 = jnp.asarray(w2, jnp.float32)
    b2 = jnp.asarray(b2, jnp.float32)

    B, F = x.shape
    H = w1.shape[0]

    # --- lane packing: P batch rows side-by-side on the 128-lane axis ---
    if F <= 128:
        F_pad = 1
        while F_pad < F:
            F_pad *= 2                      # power-of-two divisor of 128
        P = 128 // F_pad
    else:
        F_pad = _round_up(F, 128)
        P = 1
    H_pad = _round_up(H, 128 // P)          # makes P * H_pad a multiple of 128

    packed_rows = pl.cdiv(B, P)
    blk = min(block_rows, _round_up(packed_rows, 16))   # 16: bf16 sublane tile
    nblocks = pl.cdiv(packed_rows, blk)
    rows_pad = nblocks * blk
    B_pad = rows_pad * P

    # x: zero-pad batch/features, pack (B_pad, F_pad) -> (rows_pad, P*F_pad), bf16.
    if (B_pad, F_pad) != (B, F):
        x = jnp.pad(x, ((0, B_pad - B), (0, F_pad - F)))
    x_packed = x.reshape(rows_pad, P * F_pad).astype(jnp.bfloat16)

    # Block-diagonal weights (tiny, VMEM-resident across grid steps).
    w1_tp = jnp.pad(w1.T, ((0, F_pad - F), (0, H_pad - H)))            # (F_pad, H_pad)
    w1_bd = jnp.kron(jnp.eye(P, dtype=jnp.float32), w1_tp)             # (P*F_pad, P*H_pad)
    w1_bd = w1_bd.astype(jnp.bfloat16)
    b1_bd = jnp.tile(jnp.pad(b1, (0, H_pad - H)), P).reshape(1, P * H_pad)
    w2_col = jnp.pad(w2.reshape(-1), (0, H_pad - H)).reshape(H_pad, 1)
    w2_bd = jnp.kron(jnp.eye(P, dtype=jnp.float32), w2_col)            # (P*H_pad, P)
    w2_bd = w2_bd.astype(jnp.bfloat16)
    b2_b = jnp.broadcast_to(b2.reshape(1, 1), (1, P)).astype(jnp.float32)

    out = pl.pallas_call(
        _mlp_kernel,
        out_shape=jax.ShapeDtypeStruct((rows_pad, P), jnp.float32),
        grid=(nblocks,),
        in_specs=[
            pl.BlockSpec((blk, P * F_pad), lambda i: (i, 0)),          # x: streamed
            pl.BlockSpec((P * F_pad, P * H_pad), lambda i: (0, 0)),    # W1 (resident)
            pl.BlockSpec((1, P * H_pad), lambda i: (0, 0)),            # b1 (resident)
            pl.BlockSpec((P * H_pad, P), lambda i: (0, 0)),            # W2 (resident)
            pl.BlockSpec((1, P), lambda i: (0, 0)),                    # b2 (resident)
        ],
        out_specs=pl.BlockSpec((blk, P), lambda i: (i, 0)),
        compiler_params=pltpu.CompilerParams(
            dimension_semantics=("parallel",),        # megacore sharding on v7x
            vmem_limit_bytes=32 * 1024 * 1024,        # safe on v5e/v6e/v7x
        ),
    )(x_packed, w1_bd, b1_bd, w2_bd, b2_b)

    # out[r, j] is the prediction for batch row r*P + j -> flat row-major order.
    return out.reshape(-1)[:B].reshape(B, 1)


def init_params(key, no_input_features):
    """Deterministic init mirroring torch.nn.Linear defaults
    (uniform(-1/sqrt(fan_in), 1/sqrt(fan_in))), with layer2 weight clamped to [0,1]."""
    k1, k2, k3, k4 = jax.random.split(key, 4)
    bound1 = 1.0 / jnp.sqrt(jnp.float32(no_input_features))
    w1 = jax.random.uniform(k1, (20, no_input_features), jnp.float32, -bound1, bound1)
    b1 = jax.random.uniform(k2, (20,), jnp.float32, -bound1, bound1)
    bound2 = 1.0 / jnp.sqrt(jnp.float32(20))
    w2 = jax.random.uniform(k3, (1, 20), jnp.float32, -bound2, bound2)
    b2 = jax.random.uniform(k4, (1,), jnp.float32, -bound2, bound2)
    w2 = jnp.clip(w2, 0.0, 1.0)   # torch.clamp(self.layer2.weight.data, 0, 1)
    return w1, b1, w2, b2


def _reference(x, w1, b1, w2, b2):
    h = jnp.maximum(x @ w1.T + b1, 0.0)
    return jax.nn.sigmoid(h @ w2.T + b2)


if __name__ == "__main__":
    key = jax.random.PRNGKey(0)
    kx, kp = jax.random.split(key)

    batch, no_input_features = 8, 30
    x = jax.random.normal(kx, (batch, no_input_features), jnp.float32)
    w1, b1, w2, b2 = init_params(kp, no_input_features)

    y = simulate_net_forward(x, w1, b1, w2, b2)
    y = jax.block_until_ready(y)
    assert y.shape == (batch, 1)

    # The kernel streams x and feeds the MXU in bf16: tight check against a
    # reference fed the same bf16-quantized activations/weights, plus a looser
    # check against the exact f32 reference.
    def _bf16(a):
        return a.astype(jnp.bfloat16).astype(jnp.float32)

    y_q = _reference(_bf16(x), _bf16(w1), b1, _bf16(w2), b2)
    y_ref = _reference(x, w1, b1, w2, b2)
    assert jnp.allclose(y, y_q, atol=5e-3, rtol=5e-3)
    assert jnp.allclose(y, y_ref, atol=2e-2, rtol=2e-2)

    print("KERNEL_OK")
</pallas_src>

<mosaic_0001>
module attributes {stable_mosaic.version = 11 : i64} {
  func.func @_mlp_kernel(%arg0: i32, %arg1: memref<16x128xbf16, #tpu.memory_space<vmem>>, %arg2: memref<128x128xbf16, #tpu.memory_space<vmem>>, %arg3: memref<1x128xf32, #tpu.memory_space<vmem>>, %arg4: memref<128x4xbf16, #tpu.memory_space<vmem>>, %arg5: memref<1x4xf32, #tpu.memory_space<vmem>>, %arg6: memref<16x4xf32, #tpu.memory_space<vmem>>) attributes {dimension_semantics = [#tpu.dimension_semantics<parallel>], iteration_bounds = array<i64: 1>, scalar_prefetch = 0 : i64, scratch_operands = 0 : i64, tpu.core_type = #tpu.core_type<tc>, window_params = [{transform_indices = @transform_0, window_bounds = array<i64: 16, 128>}, {pipeline_mode = #tpu.pipeline_mode<synchronous>, transform_indices = @transform_1, window_bounds = array<i64: 128, 128>}, {pipeline_mode = #tpu.pipeline_mode<synchronous>, transform_indices = @transform_2, window_bounds = array<i64: 1, 128>}, {pipeline_mode = #tpu.pipeline_mode<synchronous>, transform_indices = @transform_3, window_bounds = array<i64: 128, 4>}, {pipeline_mode = #tpu.pipeline_mode<synchronous>, transform_indices = @transform_4, window_bounds = array<i64: 1, 4>}, {transform_indices = @transform_5, window_bounds = array<i64: 16, 4>}]} {
    %c0 = arith.constant 0 : index
    %c0_0 = arith.constant 0 : index
    %0 = vector.load %arg1[%c0, %c0_0] : memref<16x128xbf16, #tpu.memory_space<vmem>>, vector<16x128xbf16>
    %c0_1 = arith.constant 0 : index
    %c0_2 = arith.constant 0 : index
    %1 = vector.load %arg2[%c0_1, %c0_2] : memref<128x128xbf16, #tpu.memory_space<vmem>>, vector<128x128xbf16>
    %cst = arith.constant dense<0.000000e+00> : vector<16x128xf32>
    %2 = tpu.matmul %0, %1, %cst {dimension_numbers = #tpu.dot_dimension_numbers<[1], [0], [0], [1], [0, 0, 1, 1], [], []>} : vector<16x128xbf16>, vector<128x128xbf16>, vector<16x128xf32> -> vector<16x128xf32>
    %c0_3 = arith.constant 0 : index
    %c0_4 = arith.constant 0 : index
    %3 = vector.load %arg3[%c0_3, %c0_4] : memref<1x128xf32, #tpu.memory_space<vmem>>, vector<1x128xf32>
    %4 = vector.broadcast %3 : vector<1x128xf32> to vector<16x128xf32>
    %5 = arith.addf %2, %4 : vector<16x128xf32>
    %cst_5 = arith.constant 0.000000e+00 : f32
    %6 = vector.broadcast %cst_5 : f32 to vector<16x128xf32>
    %7 = arith.maximumf %5, %6 : vector<16x128xf32>
    %8 = arith.truncf %7 : vector<16x128xf32> to vector<16x128xbf16>
    %c0_6 = arith.constant 0 : index
    %c0_7 = arith.constant 0 : index
    %9 = vector.load %arg4[%c0_6, %c0_7] : memref<128x4xbf16, #tpu.memory_space<vmem>>, vector<128x4xbf16>
    %cst_8 = arith.constant dense<0.000000e+00> : vector<16x4xf32>
    %10 = tpu.matmul %8, %9, %cst_8 {dimension_numbers = #tpu.dot_dimension_numbers<[1], [0], [0], [1], [0, 0, 1, 1], [], []>} : vector<16x128xbf16>, vector<128x4xbf16>, vector<16x4xf32> -> vector<16x4xf32>
    %c0_9 = arith.constant 0 : index
    %c0_10 = arith.constant 0 : index
    %11 = vector.load %arg5[%c0_9, %c0_10] : memref<1x4xf32, #tpu.memory_space<vmem>>, vector<1x4xf32>
    %12 = vector.broadcast %11 : vector<1x4xf32> to vector<16x4xf32>
    %13 = arith.addf %10, %12 : vector<16x4xf32>
    %cst_11 = arith.constant 0.000000e+00 : f32
    %14 = vector.broadcast %cst_11 : f32 to vector<16x4xf32>
    %15 = arith.subf %14, %13 : vector<16x4xf32>
    %16 = math.exp %15 : vector<16x4xf32>
    %cst_12 = arith.constant 1.000000e+00 : f32
    %17 = vector.broadcast %cst_12 : f32 to vector<16x4xf32>
    %18 = arith.addf %17, %16 : vector<16x4xf32>
    %19 = tpu.reciprocal %18 {approx = true} : vector<16x4xf32> -> vector<16x4xf32>
    %c0_13 = arith.constant 0 : index
    %c0_14 = arith.constant 0 : index
    %20 = vector.load %arg6[%c0_13, %c0_14] : memref<16x4xf32, #tpu.memory_space<vmem>>, vector<16x4xf32>
    tpu.vector_store %arg6[%c0_13, %c0_14], %19 {strides = array<i32>} : memref<16x4xf32, #tpu.memory_space<vmem>>, vector<16x4xf32>,
    return
  }
  func.func @transform_0(%arg0: i32) -> (i32, i32) {
    %c0_i32 = arith.constant 0 : i32
    %c0_i32_0 = arith.constant 0 : i32
    return %arg0, %c0_i32 : i32, i32
  }
  func.func @transform_1(%arg0: i32) -> (i32, i32) {
    %c0_i32 = arith.constant 0 : i32
    %c0_i32_0 = arith.constant 0 : i32
    %c0_i32_1 = arith.constant 0 : i32
    return %c0_i32, %c0_i32_0 : i32, i32
  }
  func.func @transform_2(%arg0: i32) -> (i32, i32) {
    %c0_i32 = arith.constant 0 : i32
    %c0_i32_0 = arith.constant 0 : i32
    %c0_i32_1 = arith.constant 0 : i32
    return %c0_i32, %c0_i32_0 : i32, i32
  }
  func.func @transform_3(%arg0: i32) -> (i32, i32) {
    %c0_i32 = arith.constant 0 : i32
    %c0_i32_0 = arith.constant 0 : i32
    %c0_i32_1 = arith.constant 0 : i32
    return %c0_i32, %c0_i32_0 : i32, i32
  }
  func.func @transform_4(%arg0: i32) -> (i32, i32) {
    %c0_i32 = arith.constant 0 : i32
    %c0_i32_0 = arith.constant 0 : i32
    %c0_i32_1 = arith.constant 0 : i32
    return %c0_i32, %c0_i32_0 : i32, i32
  }
  func.func @transform_5(%arg0: i32) -> (i32, i32) {
    %c0_i32 = arith.constant 0 : i32
    %c0_i32_0 = arith.constant 0 : i32
    return %arg0, %c0_i32 : i32, i32
  }
}

</mosaic_0001>

<llo_original>
// kernel: tpu_custom_call.1
$region0: #{tpu_custom_call.1}
  #allocation0 [shape = 'u32[]', space=smem, size = 0x4, offset = 0x4, fixed_abs, tag = 'smem constant byte address 0x4 - core index']
  #allocation1 [shape = 'u32[144,128]{1,0:T(1,128)}', space=vmem, size = 0x12000, scoped, tag = 'internal scratch']
  %s0 = inlined_call_operand.hbm [shape: bf16[16,128], index: 0, kind: input, shape index: {}]
  %s1 = inlined_call_operand.vmem [shape: bf16[128,128], index: 1, kind: input, shape index: {}]
  %s2 = inlined_call_operand.vmem [shape: f32[1,128], index: 2, kind: input, shape index: {}]
  %s3 = inlined_call_operand.vmem [shape: bf16[128,4], index: 3, kind: input, shape index: {}]
  %s4 = inlined_call_operand.vmem [shape: f32[1,4], index: 4, kind: input, shape index: {}]
  %s5 = inlined_call_operand.vmem [shape: f32[16,4], index: 5, kind: output, shape index: {}]
  %s6 = sld [smem:[#allocation0]]
  $region34: #{tpu_custom_call.1} parent=0
    _
  %s8 = ssub.s32 1, %s6
  %s9 = scalar_select 0, %s8, %s6
  $region1: #{tpu_custom_call.1} parent=0
    #allocation2 [shape = 'u8[4096]{0}', space=vmem, size = 0x1000, scoped, tag = 'input window, operand 0, single buffered']
    #allocation3 [shape = 's32[1]{0}', space=sflag, size = 0x4, scoped, tag = 'scoped memory for tpu_custom_call.1']
    %10 = vsyncpa [#allocation3], 0
    // Predicated region
    $region2: #{tpu_custom_call.1} parent=1 // pred_check
      _
    $region3: #{tpu_custom_call.1} parent=1 // pred_check_branch
      %12 = sbr.rel (0) target = $region5
    $region4: #{tpu_custom_call.1} parent=1 // pred_region
      %s14 = ssub.s32 128, 128
      %15 = vsyncadd [#allocation3], %s14
      %s16 = sshll.u32 [#allocation2], 4
      %s17 = int_to_ptr.vmem [resolvable:$true] %s16
      %22 = dma.hbm_to_vmem [thread:$0]  %s0, 128, %s17, [#allocation3], 64, 64, 4
    $region5: #{tpu_custom_call.1} parent=1 // pred_fallthru
      _
    // Predicated region
    $region6: #{tpu_custom_call.1} parent=1 // pred_check
      _
    $region7: #{tpu_custom_call.1} parent=1 // pred_check_branch
      %24 = sbr.rel (0) target = $region9
    $region8: #{tpu_custom_call.1} parent=1 // pred_region
      _
    $region9: #{tpu_custom_call.1} parent=1 // pred_fallthru
      _
    // Predicated region
    $region10: #{tpu_custom_call.1} parent=1 // pred_check
      _
    $region11: #{tpu_custom_call.1} parent=1 // pred_check_branch
      %26 = sbr.rel (0) target = $region13
    $region12: #{tpu_custom_call.1} parent=1 // pred_region
      _
    $region13: #{tpu_custom_call.1} parent=1 // pred_fallthru
      _
    // Predicated region
    $region14: #{tpu_custom_call.1} parent=1 // pred_check
      _
    $region15: #{tpu_custom_call.1} parent=1 // pred_check_branch
      %28 = sbr.rel (0) target = $region17
    $region16: #{tpu_custom_call.1} parent=1 // pred_region
      _
    $region17: #{tpu_custom_call.1} parent=1 // pred_fallthru
      _
    // Predicated region
    $region18: #{tpu_custom_call.1} parent=1 // pred_check
      _
    $region19: #{tpu_custom_call.1} parent=1 // pred_check_branch
      %30 = sbr.rel (0) target = $region21
    $region20: #{tpu_custom_call.1} parent=1 // pred_region
      _
    $region21: #{tpu_custom_call.1} parent=1 // pred_fallthru
      _
    // Predicated region
    $region22: #{tpu_custom_call.1} parent=1 // pred_check
      _
    $region23: #{tpu_custom_call.1} parent=1 // pred_check_branch
      %32 = sbr.rel (0) target = $region25
    $region24: #{tpu_custom_call.1} parent=1 // pred_region
      %33 = dma.done [#allocation3], 128
    $region25: #{tpu_custom_call.1} parent=1 // pred_fallthru
      _
    %v35 = vld [vmem:[#allocation2] sm:$0xf]
    %v36 = vld [vmem:[#allocation2 + $0x4] sm:$0xf]
    %v37 = vld [vmem:[%s1] sm:$0xf]
    %v38 = vld [vmem:[%s1 + $0x4] sm:$0xf]
    %v39 = vld [vmem:[%s1 + $0x8] sm:$0xf]
    %v40 = vld [vmem:[%s1 + $0xc] sm:$0xf]
    %v41 = vld [vmem:[%s1 + $0x10] sm:$0xf]
    %v42 = vld [vmem:[%s1 + $0x14] sm:$0xf]
    %v43 = vld [vmem:[%s1 + $0x18] sm:$0xf]
    %v44 = vld [vmem:[%s1 + $0x1c] sm:$0xf]
    %v45 = vld [vmem:[%s1 + $0x20] sm:$0xf]
    %v46 = vld [vmem:[%s1 + $0x24] sm:$0xf]
    %v47 = vld [vmem:[%s1 + $0x28] sm:$0xf]
    %v48 = vld [vmem:[%s1 + $0x2c] sm:$0xf]
    %v49 = vld [vmem:[%s1 + $0x30] sm:$0xf]
    %v50 = vld [vmem:[%s1 + $0x34] sm:$0xf]
    %v51 = vld [vmem:[%s1 + $0x38] sm:$0xf]
    %v52 = vld [vmem:[%s1 + $0x3c] sm:$0xf]
    %v53 = vld [vmem:[%s2] sm:$0x1]
    %v55 = vlaneseq
    %v56 = vshrl.u32 %v55, 7
    %v57 = vsub.s32 0, %v56
    %v58 = vrot.slane %v53, %v57
    %v62 = vunpack.c.l.b16 %v35
    %v63 = vunpack.c.l.b16 %v36
    %v64 = vpack.c.b16 %v63, %v62
    %v82 = vunpack.c.l.b16 %v37
    %v83 = vunpack.c.l.b16 %v38
    %v84 = vunpack.c.l.b16 %v39
    %v85 = vunpack.c.l.b16 %v40
    %v86 = vunpack.c.l.b16 %v41
    %v87 = vunpack.c.l.b16 %v42
    %v88 = vunpack.c.l.b16 %v43
    %v89 = vunpack.c.l.b16 %v44
    %v90 = vunpack.c.l.b16 %v45
    %v91 = vunpack.c.l.b16 %v46
    %v92 = vunpack.c.l.b16 %v47
    %v93 = vunpack.c.l.b16 %v48
    %v94 = vunpack.c.l.b16 %v49
    %v95 = vunpack.c.l.b16 %v50
    %v96 = vunpack.c.l.b16 %v51
    %v97 = vunpack.c.l.b16 %v52
    %v98 = vpack.c.b16 %v83, %v82
    %v99 = vpack.c.b16 %v85, %v84
    %v100 = vpack.c.b16 %v87, %v86
    %v101 = vpack.c.b16 %v89, %v88
    %v102 = vpack.c.b16 %v91, %v90
    %v103 = vpack.c.b16 %v93, %v92
    %v104 = vpack.c.b16 %v95, %v94
    %v105 = vpack.c.b16 %v97, %v96
    %114 = vmatprep.subr.bf16.mxu0 0
    %115 = vmatpush1.bf16.msra.mxu0 %v105
    %116 = vmatprep.subr.bf16.mxu0 0
    %117 = vmatpush1.bf16.msra.mxu0 %v104
    %118 = vmatprep.subr.bf16.mxu0 0
    %119 = vmatpush1.bf16.msra.mxu0 %v103
    %120 = vmatprep.subr.bf16.mxu0 0
    %121 = vmatpush1.bf16.msra.mxu0 %v102
    %122 = vmatprep.subr.bf16.mxu0 0
    %123 = vmatpush1.bf16.msra.mxu0 %v101
    %124 = vmatprep.subr.bf16.mxu0 0
    %125 = vmatpush1.bf16.msra.mxu0 %v100
    %126 = vmatprep.subr.bf16.mxu0 0
    %127 = vmatpush1.bf16.msra.mxu0 %v99
    %128 = vmatprep.subr.bf16.mxu0 0
    %129 = vmatpush1.bf16.msra.mxu0 %v98
    %130 = vmatprep.subr.bf16.mxu0 0
    %131 = vmatpush2.bf16.msra.mxu0 0
    %132 = vmatprep.subr.bf16.mxu0 0
    %133 = vmatpush2.bf16.msra.mxu0 0
    %134 = vmatprep.subr.bf16.mxu0 0
    %135 = vmatpush2.bf16.msra.mxu0 0
    %136 = vmatprep.subr.bf16.mxu0 0
    %137 = vmatpush2.bf16.msra.mxu0 0
    %138 = vmatprep.subr.bf16.mxu0 0
    %139 = vmatpush2.bf16.msra.mxu0 0
    %140 = vmatprep.subr.bf16.mxu0 0
    %141 = vmatpush2.bf16.msra.mxu0 0
    %142 = vmatprep.subr.bf16.mxu0 0
    %143 = vmatpush2.bf16.msra.mxu0 0
    %144 = vmatprep.subr.bf16.mxu0 0
    %145 = vmatpush2.bf16.msra.mxu0 0
    %146 = vmatprep.mubr.bf16.mxu0 0
    %147 = vmatmul.mubr.bf16.gmra.mxu0 %v64
    %v148 = vpop.f32.mrf.mxu0
    %v149 = vadd.f32 %v58, %v148
    %v150 = vpop.f32.mrf.mxu0
    %v151 = vpop.f32.mrf.mxu0
    %v152 = vadd.f32 %v58, %v151
    %v153 = vpop.f32.mrf.mxu0
    %154 = vdwg.mxu0
    %v155 = vmax.f32 %v149, 0.0
    %v156 = vmax.f32 %v152, 0.0
    %v157 = vpack.c.bf16 %v156, %v155
    %v158 = vld [vmem:[%s3] sm:$0xf]
    %v159 = vld [vmem:[%s3 + $0x4] sm:$0xf]
    %v160 = vld [vmem:[%s3 + $0x8] sm:$0xf]
    %v161 = vld [vmem:[%s3 + $0xc] sm:$0xf]
    %v162 = vld [vmem:[%s3 + $0x10] sm:$0xf]
    %v163 = vld [vmem:[%s3 + $0x14] sm:$0xf]
    %v164 = vld [vmem:[%s3 + $0x18] sm:$0xf]
    %v165 = vld [vmem:[%s3 + $0x1c] sm:$0xf]
    %v166 = vld [vmem:[%s3 + $0x20] sm:$0xf]
    %v167 = vld [vmem:[%s3 + $0x24] sm:$0xf]
    %v168 = vld [vmem:[%s3 + $0x28] sm:$0xf]
    %v169 = vld [vmem:[%s3 + $0x2c] sm:$0xf]
    %v170 = vld [vmem:[%s3 + $0x30] sm:$0xf]
    %v171 = vld [vmem:[%s3 + $0x34] sm:$0xf]
    %v172 = vld [vmem:[%s3 + $0x38] sm:$0xf]
    %v173 = vld [vmem:[%s3 + $0x3c] sm:$0xf]
    %v174 = vld [vmem:[%s4] sm:$0x1]
    %v176 = vlaneseq
    %v177 = vshrl.u32 %v176, 7
    %v178 = vsub.s32 0, %v177
    %v179 = vrot.slane %v174, %v178
    %v197 = vunpack.c.l.b16 %v158
    %v198 = vunpack.c.l.b16 %v159
    %v199 = vunpack.c.l.b16 %v160
    %v200 = vunpack.c.l.b16 %v161
    %v201 = vunpack.c.l.b16 %v162
    %v202 = vunpack.c.l.b16 %v163
    %v203 = vunpack.c.l.b16 %v164
    %v204 = vunpack.c.l.b16 %v165
    %v205 = vunpack.c.l.b16 %v166
    %v206 = vunpack.c.l.b16 %v167
    %v207 = vunpack.c.l.b16 %v168
    %v208 = vunpack.c.l.b16 %v169
    %v209 = vunpack.c.l.b16 %v170
    %v210 = vunpack.c.l.b16 %v171
    %v211 = vunpack.c.l.b16 %v172
    %v212 = vunpack.c.l.b16 %v173
    %v213 = vpack.c.b16 %v198, %v197
    %v214 = vpack.c.b16 %v200, %v199
    %v215 = vpack.c.b16 %v202, %v201
    %v216 = vpack.c.b16 %v204, %v203
    %v217 = vpack.c.b16 %v206, %v205
    %v218 = vpack.c.b16 %v208, %v207
    %v219 = vpack.c.b16 %v210, %v209
    %v220 = vpack.c.b16 %v212, %v211
    %229 = vmatprep.subr.bf16.mxu0 0
    %230 = vmatpush1.bf16.msra.mxu0 %v220
    %231 = vmatprep.subr.bf16.mxu0 0
    %232 = vmatpush1.bf16.msra.mxu0 %v219
    %233 = vmatprep.subr.bf16.mxu0 0
    %234 = vmatpush1.bf16.msra.mxu0 %v218
    %235 = vmatprep.subr.bf16.mxu0 0
    %236 = vmatpush1.bf16.msra.mxu0 %v217
    %237 = vmatprep.subr.bf16.mxu0 0
    %238 = vmatpush1.bf16.msra.mxu0 %v216
    %239 = vmatprep.subr.bf16.mxu0 0
    %240 = vmatpush1.bf16.msra.mxu0 %v215
    %241 = vmatprep.subr.bf16.mxu0 0
    %242 = vmatpush1.bf16.msra.mxu0 %v214
    %243 = vmatprep.subr.bf16.mxu0 0
    %244 = vmatpush1.bf16.msra.mxu0 %v213
    %245 = vmatprep.subr.bf16.mxu0 0
    %246 = vmatpush2.bf16.msra.mxu0 0
    %247 = vmatprep.subr.bf16.mxu0 0
    %248 = vmatpush2.bf16.msra.mxu0 0
    %249 = vmatprep.subr.bf16.mxu0 0
    %250 = vmatpush2.bf16.msra.mxu0 0
    %251 = vmatprep.subr.bf16.mxu0 0
    %252 = vmatpush2.bf16.msra.mxu0 0
    %253 = vmatprep.subr.bf16.mxu0 0
    %254 = vmatpush2.bf16.msra.mxu0 0
    %255 = vmatprep.subr.bf16.mxu0 0
    %256 = vmatpush2.bf16.msra.mxu0 0
    %257 = vmatprep.subr.bf16.mxu0 0
    %258 = vmatpush2.bf16.msra.mxu0 0
    %259 = vmatprep.subr.bf16.mxu0 0
    %260 = vmatpush2.bf16.msra.mxu0 0
    %261 = vmatprep.mubr.bf16.mxu0 0
    %262 = vmatmul.mubr.bf16.gmra.mxu0 %v157
    %v263 = vpop.f32.mrf.mxu0
    %v264 = vadd.f32 %v179, %v263
    %v265 = vpop.f32.mrf.mxu0
    %v266 = vpop.f32.mrf.mxu0
    %v267 = vadd.f32 %v179, %v266
    %v268 = vpop.f32.mrf.mxu0
    %269 = vdwg.mxu0
    %v270 = vsub.f32 0.0, %v264
    %v271 = vsub.f32 0.0, %v267
    %v272 = vmul.f32 %v270, 1.442695
    %v273 = vpow.pop %v272
    %v274 = vmul.f32 %v271, 1.442695
    %v275 = vpow.pop %v274
    %v276 = vadd.f32 %v273, 1.0
    %v277 = vadd.f32 %v275, 1.0
    %v278 = vrcp.pop %v276
    %v279 = vrcp.pop %v277
    %vm280 = vcmask 31744
    %281 = vst.msk [vmem:[%s5] sm:$0xff] %vm280, %v278
    %282 = vst.msk [vmem:[%s5 + $0x8] sm:$0xff] %vm280, %v279
    // Predicated region
    $region26: #{tpu_custom_call.1} parent=1 // pred_check
      _
    $region27: #{tpu_custom_call.1} parent=1 // pred_check_branch
      %284 = sbr.rel (0) target = $region29
    $region28: #{tpu_custom_call.1} parent=1 // pred_region
      _
    $region29: #{tpu_custom_call.1} parent=1 // pred_fallthru
      _
    // Predicated region
    $region30: #{tpu_custom_call.1} parent=1 // pred_check
      _
    $region31: #{tpu_custom_call.1} parent=1 // pred_check_branch
      %286 = sbr.rel (0) target = $region33
    $region32: #{tpu_custom_call.1} parent=1 // pred_region
      _
    $region33: #{tpu_custom_call.1} parent=1 // pred_fallthru
      _
    %287 = vsyncpa [#allocation3], 1

</llo_original>
